<compile_context>
chip_gen: v7x
topology: tpu7x:2x2x1
jax: 0.10.0
libtpu: 0.0.40
codegen_flags: <defaults>
</compile_context>

<pallas_src>
import functools

import jax
import jax.numpy as jnp
from jax.experimental import pallas as pl
from jax.experimental.pallas import tpu as pltpu


F_IN = 16 * 5 * 5       # 400
HIDDEN = 120
HIDDEN_PAD = 128        # lane-aligned hidden dim (extra W2 rows stay zero)
LANE = 128
TILE_B_CAP = 2048       # keeps double-buffered x+out+weights < ~9 MiB (v5e safe)


def _round_up(a, m):
    return ((a + m - 1) // m) * m


# ------------------------------------------------------------------ kernel

def _subnet_fc_kernel(x_ref, w1_ref, b1_ref, w2_ref, b2_ref, out_ref):
    """Fused relu(x @ W1 + b1) @ W2 + b2 for one batch tile.

    x_ref : (TILE_B, 400)            caller dtype (f32 or bf16)
    w1_ref: (400, 128)               hidden padded 120 -> 128
    b1_ref: (1, 128)    f32
    w2_ref: (128, C_pad)             padded rows exactly zero
    b2_ref: (1, C_pad)  f32
    out   : (TILE_B, C_pad)          caller dtype, lane-dense store
    """
    h = jnp.dot(x_ref[...], w1_ref[...], preferred_element_type=jnp.float32)
    h = jnp.maximum(h + b1_ref[...], 0.0)
    out = jnp.dot(h.astype(w2_ref.dtype), w2_ref[...],
                  preferred_element_type=jnp.float32) + b2_ref[...]
    out_ref[...] = out.astype(out_ref.dtype)


# ----------------------------------------------------- one-time weight prep

def prepare_fc_params(w_fc1, b_fc1, w_fc2, b_fc2, *, dtype=jnp.float32):
    """Transpose + lane-pad the torch-layout weights ONCE (not per forward).

    w_fc1: (120, 400), b_fc1: (120,), w_fc2: (C, 120), b_fc2: (C,)
    """
    H = w_fc1.shape[0]
    C = w_fc2.shape[0]
    C_pad = _round_up(max(C, LANE), LANE)
    w1 = jnp.zeros((F_IN, HIDDEN_PAD), dtype).at[:, :H].set(w_fc1.T.astype(dtype))
    b1 = jnp.zeros((1, HIDDEN_PAD), jnp.float32).at[0, :H].set(
        b_fc1.astype(jnp.float32))
    w2 = jnp.zeros((HIDDEN_PAD, C_pad), dtype).at[:H, :C].set(
        w_fc2.T.astype(dtype))
    b2 = jnp.zeros((1, C_pad), jnp.float32).at[0, :C].set(
        b_fc2.astype(jnp.float32))
    return {"w1": w1, "b1": b1, "w2": w2, "b2": b2}


def _choose_tile_b(B, cap=TILE_B_CAP):
    if B <= 8:
        return B                                   # single full-extent block
    # Aim for >= 2 grid steps (v7x megacore) while amortizing per-step overhead.
    tile = min(cap, _round_up(pl.cdiv(B, 2), 8))
    return min(tile, _round_up(B, 8))


# --------------------------------------------------------------- call glue

def subnet_fc_forward(x, prepared, *, num_classes, tile_b=None):
    """x: (B, 400) in caller dtype; `prepared` from prepare_fc_params."""
    B, f_in = x.shape
    assert f_in == F_IN, f_in
    C_pad = prepared["w2"].shape[1]

    if tile_b is None:
        tile_b = _choose_tile_b(B)
    grid = (pl.cdiv(B, tile_b),)       # ragged last block: rows independent

    out = pl.pallas_call(
        _subnet_fc_kernel,
        out_shape=jax.ShapeDtypeStruct((B, C_pad), x.dtype),
        grid_spec=pltpu.PrefetchScalarGridSpec(
            num_scalar_prefetch=0,
            grid=grid,
            in_specs=[
                pl.BlockSpec((tile_b, F_IN), lambda i: (i, 0)),       # x tile
                pl.BlockSpec((F_IN, HIDDEN_PAD), lambda i: (0, 0)),   # W1 resident
                pl.BlockSpec((1, HIDDEN_PAD), lambda i: (0, 0)),      # b1 resident
                pl.BlockSpec((HIDDEN_PAD, C_pad), lambda i: (0, 0)),  # W2 resident
                pl.BlockSpec((1, C_pad), lambda i: (0, 0)),           # b2 resident
            ],
            out_specs=pl.BlockSpec((tile_b, C_pad), lambda i: (i, 0)),
        ),
        compiler_params=pltpu.CompilerParams(
            dimension_semantics=("parallel",)),
    )(x, prepared["w1"], prepared["b1"], prepared["w2"], prepared["b2"])

    return out[:, :num_classes]        # slice only the lane pad (no batch pass)


# ------------------------------------------------------------- params / ref

def init_params(key, num_classes=10):
    ks = jax.random.split(key, 4)

    def u(k, shape, fan_in):
        bound = 1.0 / jnp.sqrt(fan_in)
        return jax.random.uniform(k, shape, jnp.float32, -bound, bound)

    return {
        "w_fc1": u(ks[0], (HIDDEN, F_IN), F_IN),
        "b_fc1": u(ks[1], (HIDDEN,), F_IN),
        "w_fc2": u(ks[2], (num_classes, HIDDEN), HIDDEN),
        "b_fc2": u(ks[3], (num_classes,), HIDDEN),
    }


def reference_forward(x, p):
    h = jnp.maximum(x @ p["w_fc1"].T + p["b_fc1"], 0.0)
    return h @ p["w_fc2"].T + p["b_fc2"]


# -------------------------------------------------------------------- main

if __name__ == "__main__":
    key = jax.random.PRNGKey(0)
    k_x, k_p = jax.random.split(key)

    B, num_classes = 2, 10
    x = jax.random.normal(k_x, (B, F_IN), dtype=jnp.float32)        # (2, 400)
    params = init_params(k_p, num_classes=num_classes)

    # One-time weight prep (transpose + pad), hoisted out of the forward.
    prepared = prepare_fc_params(params["w_fc1"], params["b_fc1"],
                                 params["w_fc2"], params["b_fc2"])

    fwd = jax.jit(functools.partial(subnet_fc_forward, num_classes=num_classes))

    out = jax.block_until_ready(fwd(x, prepared))
    ref = jax.block_until_ready(reference_forward(x, params))

    assert out.shape == (B, num_classes), out.shape
    assert jnp.allclose(out, ref, rtol=1e-4, atol=1e-4), (
        float(jnp.max(jnp.abs(out - ref))))

    print("KERNEL_OK")
</pallas_src>

<mosaic_0001>
module attributes {stable_mosaic.version = 11 : i64} {
  func.func @_subnet_fc_kernel(%arg0: i32, %arg1: memref<2x400xf32, #tpu.memory_space<vmem>>, %arg2: memref<400x128xf32, #tpu.memory_space<vmem>>, %arg3: memref<1x128xf32, #tpu.memory_space<vmem>>, %arg4: memref<128x128xf32, #tpu.memory_space<vmem>>, %arg5: memref<1x128xf32, #tpu.memory_space<vmem>>, %arg6: memref<2x128xf32, #tpu.memory_space<vmem>>) attributes {dimension_semantics = [#tpu.dimension_semantics<parallel>], iteration_bounds = array<i64: 1>, scalar_prefetch = 0 : i64, scratch_operands = 0 : i64, tpu.core_type = #tpu.core_type<tc>, window_params = [{transform_indices = @transform_0, window_bounds = array<i64: 2, 400>}, {pipeline_mode = #tpu.pipeline_mode<synchronous>, transform_indices = @transform_1, window_bounds = array<i64: 400, 128>}, {pipeline_mode = #tpu.pipeline_mode<synchronous>, transform_indices = @transform_2, window_bounds = array<i64: 1, 128>}, {pipeline_mode = #tpu.pipeline_mode<synchronous>, transform_indices = @transform_3, window_bounds = array<i64: 128, 128>}, {pipeline_mode = #tpu.pipeline_mode<synchronous>, transform_indices = @transform_4, window_bounds = array<i64: 1, 128>}, {transform_indices = @transform_5, window_bounds = array<i64: 2, 128>}]} {
    %c0 = arith.constant 0 : index
    %c0_0 = arith.constant 0 : index
    %0 = vector.load %arg1[%c0, %c0_0] : memref<2x400xf32, #tpu.memory_space<vmem>>, vector<2x400xf32>
    %c0_1 = arith.constant 0 : index
    %c0_2 = arith.constant 0 : index
    %1 = vector.load %arg2[%c0_1, %c0_2] : memref<400x128xf32, #tpu.memory_space<vmem>>, vector<400x128xf32>
    %cst = arith.constant dense<0.000000e+00> : vector<2x128xf32>
    %2 = tpu.matmul %0, %1, %cst {dimension_numbers = #tpu.dot_dimension_numbers<[1], [0], [0], [1], [0, 0, 1, 1], [], []>} : vector<2x400xf32>, vector<400x128xf32>, vector<2x128xf32> -> vector<2x128xf32>
    %c0_3 = arith.constant 0 : index
    %c0_4 = arith.constant 0 : index
    %3 = vector.load %arg3[%c0_3, %c0_4] : memref<1x128xf32, #tpu.memory_space<vmem>>, vector<1x128xf32>
    %4 = vector.broadcast %3 : vector<1x128xf32> to vector<2x128xf32>
    %5 = arith.addf %2, %4 : vector<2x128xf32>
    %cst_5 = arith.constant 0.000000e+00 : f32
    %6 = vector.broadcast %cst_5 : f32 to vector<2x128xf32>
    %7 = arith.maximumf %5, %6 : vector<2x128xf32>
    %c0_6 = arith.constant 0 : index
    %c0_7 = arith.constant 0 : index
    %8 = vector.load %arg4[%c0_6, %c0_7] : memref<128x128xf32, #tpu.memory_space<vmem>>, vector<128x128xf32>
    %cst_8 = arith.constant dense<0.000000e+00> : vector<2x128xf32>
    %9 = tpu.matmul %7, %8, %cst_8 {dimension_numbers = #tpu.dot_dimension_numbers<[1], [0], [0], [1], [0, 0, 1, 1], [], []>} : vector<2x128xf32>, vector<128x128xf32>, vector<2x128xf32> -> vector<2x128xf32>
    %c0_9 = arith.constant 0 : index
    %c0_10 = arith.constant 0 : index
    %10 = vector.load %arg5[%c0_9, %c0_10] : memref<1x128xf32, #tpu.memory_space<vmem>>, vector<1x128xf32>
    %11 = vector.broadcast %10 : vector<1x128xf32> to vector<2x128xf32>
    %12 = arith.addf %9, %11 : vector<2x128xf32>
    %c0_11 = arith.constant 0 : index
    %c0_12 = arith.constant 0 : index
    %13 = vector.load %arg6[%c0_11, %c0_12] : memref<2x128xf32, #tpu.memory_space<vmem>>, vector<2x128xf32>
    tpu.vector_store %arg6[%c0_11, %c0_12], %12 {strides = array<i32>} : memref<2x128xf32, #tpu.memory_space<vmem>>, vector<2x128xf32>,
    return
  }
  func.func @transform_0(%arg0: i32) -> (i32, i32) {
    %c0_i32 = arith.constant 0 : i32
    %c0_i32_0 = arith.constant 0 : i32
    return %arg0, %c0_i32 : i32, i32
  }
  func.func @transform_1(%arg0: i32) -> (i32, i32) {
    %c0_i32 = arith.constant 0 : i32
    %c0_i32_0 = arith.constant 0 : i32
    %c0_i32_1 = arith.constant 0 : i32
    return %c0_i32, %c0_i32_0 : i32, i32
  }
  func.func @transform_2(%arg0: i32) -> (i32, i32) {
    %c0_i32 = arith.constant 0 : i32
    %c0_i32_0 = arith.constant 0 : i32
    %c0_i32_1 = arith.constant 0 : i32
    return %c0_i32, %c0_i32_0 : i32, i32
  }
  func.func @transform_3(%arg0: i32) -> (i32, i32) {
    %c0_i32 = arith.constant 0 : i32
    %c0_i32_0 = arith.constant 0 : i32
    %c0_i32_1 = arith.constant 0 : i32
    return %c0_i32, %c0_i32_0 : i32, i32
  }
  func.func @transform_4(%arg0: i32) -> (i32, i32) {
    %c0_i32 = arith.constant 0 : i32
    %c0_i32_0 = arith.constant 0 : i32
    %c0_i32_1 = arith.constant 0 : i32
    return %c0_i32, %c0_i32_0 : i32, i32
  }
  func.func @transform_5(%arg0: i32) -> (i32, i32) {
    %c0_i32 = arith.constant 0 : i32
    %c0_i32_0 = arith.constant 0 : i32
    return %arg0, %c0_i32 : i32, i32
  }
}

</mosaic_0001>

<llo_original>
// kernel: subnet_fc_forward.1
$region0: #{subnet_fc_forward.1}
  #allocation0 [shape = 'u32[]', space=smem, size = 0x4, offset = 0x4, fixed_abs, tag = 'smem constant byte address 0x4 - core index']
  #allocation1 [shape = 'u32[144,128]{1,0:T(1,128)}', space=vmem, size = 0x12000, scoped, tag = 'internal scratch']
  %s0 = inlined_call_operand.hbm [shape: f32[2,400], index: 0, kind: input, shape index: {}]
  %s1 = inlined_call_operand.hbm [shape: f32[400,128], index: 1, kind: input, shape index: {}]
  %s2 = inlined_call_operand.vmem [shape: f32[1,128], index: 2, kind: input, shape index: {}]
  %s3 = inlined_call_operand.hbm [shape: f32[128,128], index: 3, kind: input, shape index: {}]
  %s4 = inlined_call_operand.vmem [shape: f32[1,128], index: 4, kind: input, shape index: {}]
  %s5 = inlined_call_operand.hbm [shape: f32[2,128], index: 5, kind: output, shape index: {}]
  %s6 = sld [smem:[#allocation0]]
  $region42: #{subnet_fc_forward.1} parent=0
    _
  %s8 = ssub.s32 1, %s6
  %s9 = scalar_select 0, %s8, %s6
  $region1: #{subnet_fc_forward.1} parent=0
    #allocation2 [shape = 'u8[4096]{0}', space=vmem, size = 0x1000, scoped, tag = 'input window, operand 0, single buffered']
    #allocation3 [shape = 's32[1]{0}', space=sflag, size = 0x4, scoped, tag = 'scoped memory for subnet_fc_forward.1']
    #allocation4 [shape = 's32[1]{0}', space=sflag, size = 0x4, scoped, tag = 'scoped memory for subnet_fc_forward.1']
    #allocation5 [shape = 'u8[204800]{0}', space=vmem, size = 0x32000, scoped, tag = 'input window, operand 1, single buffered']
    #allocation6 [shape = 's32[1]{0}', space=sflag, size = 0x4, scoped, tag = 'scoped memory for subnet_fc_forward.1']
    #allocation7 [shape = 'u8[65536]{0}', space=vmem, size = 0x10000, scoped, tag = 'input window, operand 3, single buffered']
    #allocation8 [shape = 'u8[1024]{0}', space=vmem, size = 0x400, scoped, tag = 'output window, operand 0, single buffered']
    %10 = vsyncpa [#allocation3], 0
    %11 = vsyncpa [#allocation6], 0
    %12 = vsyncpa [#allocation4], 0
    // Predicated region
    $region2: #{subnet_fc_forward.1} parent=1 // pred_check
      _
    $region3: #{subnet_fc_forward.1} parent=1 // pred_check_branch
      %14 = sbr.rel (0) target = $region5
    $region4: #{subnet_fc_forward.1} parent=1 // pred_region
      %s16 = ssub.s32 128, 128
      %17 = vsyncadd [#allocation3], %s16
      %s19 = sshll.u32 [#allocation2], 4
      %s20 = int_to_ptr.vmem [resolvable:$true] %s19
      %22 = dma.hbm_to_vmem [thread:$0]  %s0, 128, %s20, [#allocation3]
    $region5: #{subnet_fc_forward.1} parent=1 // pred_fallthru
      _
    // Predicated region
    $region6: #{subnet_fc_forward.1} parent=1 // pred_check
      _
    $region7: #{subnet_fc_forward.1} parent=1 // pred_check_branch
      %24 = sbr.rel (0) target = $region9
    $region8: #{subnet_fc_forward.1} parent=1 // pred_region
      %s26 = ssub.s32 6400, 6400
      %27 = vsyncadd [#allocation6], %s26
      %s28 = sshll.u32 [#allocation5], 4
      %s29 = int_to_ptr.vmem [resolvable:$true] %s28
      %34 = dma.hbm_to_vmem [thread:$0]  %s1, 6400, %s29, [#allocation6], 128, 128, 8
    $region9: #{subnet_fc_forward.1} parent=1 // pred_fallthru
      _
    // Predicated region
    $region10: #{subnet_fc_forward.1} parent=1 // pred_check
      _
    $region11: #{subnet_fc_forward.1} parent=1 // pred_check_branch
      %36 = sbr.rel (0) target = $region13
    $region12: #{subnet_fc_forward.1} parent=1 // pred_region
      _
    $region13: #{subnet_fc_forward.1} parent=1 // pred_fallthru
      _
    // Predicated region
    $region14: #{subnet_fc_forward.1} parent=1 // pred_check
      _
    $region15: #{subnet_fc_forward.1} parent=1 // pred_check_branch
      %38 = sbr.rel (0) target = $region17
    $region16: #{subnet_fc_forward.1} parent=1 // pred_region
      %s40 = ssub.s32 2048, 2048
      %41 = vsyncadd [#allocation6], %s40
      %s42 = sshll.u32 [#allocation7], 4
      %s43 = int_to_ptr.vmem [resolvable:$true] %s42
      %48 = dma.hbm_to_vmem [thread:$0]  %s3, 2048, %s43, [#allocation6], 128, 128, 8
    $region17: #{subnet_fc_forward.1} parent=1 // pred_fallthru
      _
    // Predicated region
    $region18: #{subnet_fc_forward.1} parent=1 // pred_check
      _
    $region19: #{subnet_fc_forward.1} parent=1 // pred_check_branch
      %50 = sbr.rel (0) target = $region21
    $region20: #{subnet_fc_forward.1} parent=1 // pred_region
      _
    $region21: #{subnet_fc_forward.1} parent=1 // pred_fallthru
      _
    // Predicated region
    $region22: #{subnet_fc_forward.1} parent=1 // pred_check
      _
    $region23: #{subnet_fc_forward.1} parent=1 // pred_check_branch
      %52 = sbr.rel (0) target = $region25
    $region24: #{subnet_fc_forward.1} parent=1 // pred_region
      %53 = dma.done [#allocation3], 128
    $region25: #{subnet_fc_forward.1} parent=1 // pred_fallthru
      _
    // Predicated region
    $region26: #{subnet_fc_forward.1} parent=1 // pred_check
      _
    $region27: #{subnet_fc_forward.1} parent=1 // pred_check_branch
      %55 = sbr.rel (0) target = $region29
    $region28: #{subnet_fc_forward.1} parent=1 // pred_region
      %56 = dma.done [#allocation6], 6400
    $region29: #{subnet_fc_forward.1} parent=1 // pred_fallthru
      _
    // Predicated region
    $region30: #{subnet_fc_forward.1} parent=1 // pred_check
      _
    $region31: #{subnet_fc_forward.1} parent=1 // pred_check_branch
      %58 = sbr.rel (0) target = $region33
    $region32: #{subnet_fc_forward.1} parent=1 // pred_region
      %59 = dma.done [#allocation6], 2048
    $region33: #{subnet_fc_forward.1} parent=1 // pred_fallthru
      _
    %v60 = vld [vmem:[#allocation2] sm:$0xff]
    %v61 = vld [vmem:[#allocation5] sm:$0xff]
    %v62 = vld [vmem:[#allocation5 + $0x8] sm:$0xff]
    %v63 = vld [vmem:[#allocation5 + $0x10] sm:$0xff]
    %v64 = vld [vmem:[#allocation5 + $0x18] sm:$0xff]
    %v65 = vld [vmem:[#allocation5 + $0x20] sm:$0xff]
    %v66 = vld [vmem:[#allocation5 + $0x28] sm:$0xff]
    %v67 = vld [vmem:[#allocation5 + $0x30] sm:$0xff]
    %v68 = vld [vmem:[#allocation5 + $0x38] sm:$0xff]
    %v69 = vld [vmem:[#allocation5 + $0x40] sm:$0xff]
    %v70 = vld [vmem:[#allocation5 + $0x48] sm:$0xff]
    %v71 = vld [vmem:[#allocation5 + $0x50] sm:$0xff]
    %v72 = vld [vmem:[#allocation5 + $0x58] sm:$0xff]
    %v73 = vld [vmem:[#allocation5 + $0x60] sm:$0xff]
    %v74 = vld [vmem:[#allocation5 + $0x68] sm:$0xff]
    %v75 = vld [vmem:[#allocation5 + $0x70] sm:$0xff]
    %v76 = vld [vmem:[#allocation5 + $0x78] sm:$0xff]
    %v77 = vld [vmem:[#allocation5 + $0x80] sm:$0xff]
    %v78 = vld [vmem:[#allocation5 + $0x88] sm:$0xff]
    %v79 = vld [vmem:[#allocation5 + $0x90] sm:$0xff]
    %v80 = vld [vmem:[#allocation5 + $0x98] sm:$0xff]
    %v81 = vld [vmem:[#allocation5 + $0xa0] sm:$0xff]
    %v82 = vld [vmem:[#allocation5 + $0xa8] sm:$0xff]
    %v83 = vld [vmem:[#allocation5 + $0xb0] sm:$0xff]
    %v84 = vld [vmem:[#allocation5 + $0xb8] sm:$0xff]
    %v85 = vld [vmem:[#allocation5 + $0xc0] sm:$0xff]
    %v86 = vld [vmem:[#allocation5 + $0xc8] sm:$0xff]
    %v87 = vld [vmem:[#allocation5 + $0xd0] sm:$0xff]
    %v88 = vld [vmem:[#allocation5 + $0xd8] sm:$0xff]
    %v89 = vld [vmem:[#allocation5 + $0xe0] sm:$0xff]
    %v90 = vld [vmem:[#allocation5 + $0xe8] sm:$0xff]
    %v91 = vld [vmem:[#allocation5 + $0xf0] sm:$0xff]
    %v92 = vld [vmem:[#allocation5 + $0xf8] sm:$0xff]
    %v93 = vld [vmem:[#allocation5 + $0x100] sm:$0xff]
    %v94 = vld [vmem:[#allocation5 + $0x108] sm:$0xff]
    %v95 = vld [vmem:[#allocation5 + $0x110] sm:$0xff]
    %v96 = vld [vmem:[#allocation5 + $0x118] sm:$0xff]
    %v97 = vld [vmem:[#allocation5 + $0x120] sm:$0xff]
    %v98 = vld [vmem:[#allocation5 + $0x128] sm:$0xff]
    %v99 = vld [vmem:[#allocation5 + $0x130] sm:$0xff]
    %v100 = vld [vmem:[#allocation5 + $0x138] sm:$0xff]
    %v101 = vld [vmem:[#allocation5 + $0x140] sm:$0xff]
    %v102 = vld [vmem:[#allocation5 + $0x148] sm:$0xff]
    %v103 = vld [vmem:[#allocation5 + $0x150] sm:$0xff]
    %v104 = vld [vmem:[#allocation5 + $0x158] sm:$0xff]
    %v105 = vld [vmem:[#allocation5 + $0x160] sm:$0xff]
    %v106 = vld [vmem:[#allocation5 + $0x168] sm:$0xff]
    %v107 = vld [vmem:[#allocation5 + $0x170] sm:$0xff]
    %v108 = vld [vmem:[#allocation5 + $0x178] sm:$0xff]
    %v109 = vld [vmem:[#allocation5 + $0x180] sm:$0xff]
    %v110 = vld [vmem:[#allocation5 + $0x188] sm:$0xff]
    %v111 = vld [vmem:[%s2] sm:$0x1]
    %v113 = vlaneseq
    %v114 = vshrl.u32 %v113, 7
    %v115 = vsub.s32 0, %v114
    %v116 = vrot.slane %v111, %v115
    %v119 = vcombine.high %v60, %v60
    %v121 = vunpack.c.l.s4 1983009808
    %v122 = vunpack.c.0.s8 %v121
    %v123 = vlaneseq
    %v124 = vshrl.u32 %v123, 7
    %v125 = vsub.s32 %v122, %v124
    %v126 = vrot.slane %v60, %v125
    %v128 = vunpack.c.l.s4 1983009808
    %v129 = vunpack.c.0.s8 %v128
    %v130 = vlaneseq
    %v131 = vshrl.u32 %v130, 7
    %v132 = vsub.s32 %v129, %v131
    %v133 = vrot.slane %v119, %v132
    %v134 = vcombine.high %v126, %v126
    %v135 = vcombine.high %v133, %v133
    %vm139 = vcmask 130048
    %v140 = vsel %vm139, %v135, 0
    %142 = vmatprep.subr.mxu0 0.0
    %143 = vmatpush1.msra.mxu0 %v61
    %144 = vmatprep.subr.mxu0 0.0
    %145 = vmatpush1.msra.mxu0 %v62
    %146 = vmatprep.subr.mxu0 0.0
    %147 = vmatpush1.msra.mxu0 %v63
    %148 = vmatprep.subr.mxu0 0.0
    %149 = vmatpush1.msra.mxu0 %v64
    %150 = vmatprep.subr.mxu0 0.0
    %151 = vmatpush1.msra.mxu0 %v65
    %152 = vmatprep.subr.mxu0 0.0
    %153 = vmatpush1.msra.mxu0 %v66
    %154 = vmatprep.subr.mxu0 0.0
    %155 = vmatpush1.msra.mxu0 %v67
    %156 = vmatprep.subr.mxu0 0.0
    %157 = vmatpush1.msra.mxu0 %v68
    %158 = vmatprep.subr.mxu0 0.0
    %159 = vmatpush1.msra.mxu0 %v69
    %160 = vmatprep.subr.mxu0 0.0
    %161 = vmatpush1.msra.mxu0 %v70
    %162 = vmatprep.subr.mxu0 0.0
    %163 = vmatpush1.msra.mxu0 %v71
    %164 = vmatprep.subr.mxu0 0.0
    %165 = vmatpush1.msra.mxu0 %v72
    %166 = vmatprep.subr.mxu0 0.0
    %167 = vmatpush1.msra.mxu0 %v73
    %168 = vmatprep.subr.mxu0 0.0
    %169 = vmatpush1.msra.mxu0 %v74
    %170 = vmatprep.subr.mxu0 0.0
    %171 = vmatpush1.msra.mxu0 %v75
    %172 = vmatprep.subr.mxu0 0.0
    %173 = vmatpush1.msra.mxu0 %v76
    %174 = vmatprep.subr.mxu0 0.0
    %175 = vmatpush1.msra.mxu0 %v77
    %176 = vmatprep.subr.mxu0 0.0
    %177 = vmatpush1.msra.mxu0 %v78
    %178 = vmatprep.subr.mxu0 0.0
    %179 = vmatpush1.msra.mxu0 %v79
    %180 = vmatprep.subr.mxu0 0.0
    %181 = vmatpush1.msra.mxu0 %v80
    %182 = vmatprep.subr.mxu0 0.0
    %183 = vmatpush1.msra.mxu0 %v81
    %184 = vmatprep.subr.mxu0 0.0
    %185 = vmatpush1.msra.mxu0 %v82
    %186 = vmatprep.subr.mxu0 0.0
    %187 = vmatpush1.msra.mxu0 %v83
    %188 = vmatprep.subr.mxu0 0.0
    %189 = vmatpush1.msra.mxu0 %v84
    %190 = vmatprep.subr.mxu0 0.0
    %191 = vmatpush1.msra.mxu0 %v85
    %192 = vmatprep.subr.mxu0 0.0
    %193 = vmatpush1.msra.mxu0 %v86
    %194 = vmatprep.subr.mxu0 0.0
    %195 = vmatpush1.msra.mxu0 %v87
    %196 = vmatprep.subr.mxu0 0.0
    %197 = vmatpush1.msra.mxu0 %v88
    %198 = vmatprep.subr.mxu0 0.0
    %199 = vmatpush1.msra.mxu0 %v89
    %200 = vmatprep.subr.mxu0 0.0
    %201 = vmatpush1.msra.mxu0 %v90
    %202 = vmatprep.subr.mxu0 0.0
    %203 = vmatpush1.msra.mxu0 %v91
    %204 = vmatprep.subr.mxu0 0.0
    %205 = vmatpush1.msra.mxu0 %v92
    %206 = vmatprep.mubr.f32.mxu0 %v134
    %207 = vmatmul.mubr.f32.gmra.mrb[0].mxu0 %v126
    %v208 = vpop.f32.mrb[0].mxu0
    %v209 = vadd.f32 %v116, %v208
    %v210 = vpop.f32.mrb[0].mxu0
    %211 = vdwg.mxu0
    %212 = vmatprep.subr.mxu0 0.0
    %213 = vmatpush1.msra.mxu0 %v93
    %214 = vmatprep.subr.mxu0 0.0
    %215 = vmatpush1.msra.mxu0 %v94
    %216 = vmatprep.subr.mxu0 0.0
    %217 = vmatpush1.msra.mxu0 %v95
    %218 = vmatprep.subr.mxu0 0.0
    %219 = vmatpush1.msra.mxu0 %v96
    %220 = vmatprep.subr.mxu0 0.0
    %221 = vmatpush1.msra.mxu0 %v97
    %222 = vmatprep.subr.mxu0 0.0
    %223 = vmatpush1.msra.mxu0 %v98
    %224 = vmatprep.subr.mxu0 0.0
    %225 = vmatpush1.msra.mxu0 %v99
    %226 = vmatprep.subr.mxu0 0.0
    %227 = vmatpush1.msra.mxu0 %v100
    %228 = vmatprep.subr.mxu0 0.0
    %229 = vmatpush1.msra.mxu0 %v101
    %230 = vmatprep.subr.mxu0 0.0
    %231 = vmatpush1.msra.mxu0 %v102
    %232 = vmatprep.subr.mxu0 0.0
    %233 = vmatpush1.msra.mxu0 %v103
    %234 = vmatprep.subr.mxu0 0.0
    %235 = vmatpush1.msra.mxu0 %v104
    %236 = vmatprep.subr.mxu0 0.0
    %237 = vmatpush1.msra.mxu0 %v105
    %238 = vmatprep.subr.mxu0 0.0
    %239 = vmatpush1.msra.mxu0 %v106
    %240 = vmatprep.subr.mxu0 0.0
    %241 = vmatpush1.msra.mxu0 %v107
    %242 = vmatprep.subr.mxu0 0.0
    %243 = vmatpush1.msra.mxu0 %v108
    %244 = vmatprep.subr.mxu0 0.0
    %245 = vmatpush1.msra.mxu0 %v109
    %246 = vmatprep.subr.mxu0 0.0
    %247 = vmatpush1.msra.mxu0 %v110
    %248 = vmatprep.subr.mxu0 0.0
    %249 = vmatpush1.msra.mxu0 0.0
    %250 = vmatprep.subr.mxu0 0.0
    %251 = vmatpush1.msra.mxu0 0.0
    %252 = vmatprep.subr.mxu0 0.0
    %253 = vmatpush1.msra.mxu0 0.0
    %254 = vmatprep.subr.mxu0 0.0
    %255 = vmatpush1.msra.mxu0 0.0
    %256 = vmatprep.subr.mxu0 0.0
    %257 = vmatpush1.msra.mxu0 0.0
    %258 = vmatprep.subr.mxu0 0.0
    %259 = vmatpush1.msra.mxu0 0.0
    %260 = vmatprep.subr.mxu0 0.0
    %261 = vmatpush1.msra.mxu0 0.0
    %262 = vmatprep.subr.mxu0 0.0
    %263 = vmatpush1.msra.mxu0 0.0
    %264 = vmatprep.subr.mxu0 0.0
    %265 = vmatpush1.msra.mxu0 0.0
    %266 = vmatprep.subr.mxu0 0.0
    %267 = vmatpush1.msra.mxu0 0.0
    %268 = vmatprep.subr.mxu0 0.0
    %269 = vmatpush1.msra.mxu0 0.0
    %270 = vmatprep.subr.mxu0 0.0
    %271 = vmatpush1.msra.mxu0 0.0
    %272 = vmatprep.subr.mxu0 0.0
    %273 = vmatpush1.msra.mxu0 0.0
    %274 = vmatprep.subr.mxu0 0.0
    %275 = vmatpush1.msra.mxu0 0.0
    %276 = vmatprep.mubr.f32.mxu0 %v140
    %277 = vmatmul.mubr.f32.gmra.mrb[0].mxu0 %v133
    %v278 = vpop.f32.mrb[0].mxu0
    %v279 = vadd.f32 %v209, %v278
    %v280 = vpop.f32.mrb[0].mxu0
    %281 = vdwg.mxu0
    %v282 = vmax.f32 %v279, 0.0
    %v283 = vld [vmem:[#allocation7] sm:$0xff]
    %v284 = vld [vmem:[#allocation7 + $0x8] sm:$0xff]
    %v285 = vld [vmem:[#allocation7 + $0x10] sm:$0xff]
    %v286 = vld [vmem:[#allocation7 + $0x18] sm:$0xff]
    %v287 = vld [vmem:[#allocation7 + $0x20] sm:$0xff]
    %v288 = vld [vmem:[#allocation7 + $0x28] sm:$0xff]
    %v289 = vld [vmem:[#allocation7 + $0x30] sm:$0xff]
    %v290 = vld [vmem:[#allocation7 + $0x38] sm:$0xff]
    %v291 = vld [vmem:[#allocation7 + $0x40] sm:$0xff]
    %v292 = vld [vmem:[#allocation7 + $0x48] sm:$0xff]
    %v293 = vld [vmem:[#allocation7 + $0x50] sm:$0xff]
    %v294 = vld [vmem:[#allocation7 + $0x58] sm:$0xff]
    %v295 = vld [vmem:[#allocation7 + $0x60] sm:$0xff]
    %v296 = vld [vmem:[#allocation7 + $0x68] sm:$0xff]
    %v297 = vld [vmem:[#allocation7 + $0x70] sm:$0xff]
    %v298 = vld [vmem:[#allocation7 + $0x78] sm:$0xff]
    %v299 = vld [vmem:[%s4] sm:$0x1]
    %v301 = vlaneseq
    %v302 = vshrl.u32 %v301, 7
    %v303 = vsub.s32 0, %v302
    %v304 = vrot.slane %v299, %v303
    %306 = vmatprep.subr.mxu0 0.0
    %307 = vmatpush1.msra.mxu0 %v283
    %308 = vmatprep.subr.mxu0 0.0
    %309 = vmatpush1.msra.mxu0 %v284
    %310 = vmatprep.subr.mxu0 0.0
    %311 = vmatpush1.msra.mxu0 %v285
    %312 = vmatprep.subr.mxu0 0.0
    %313 = vmatpush1.msra.mxu0 %v286
    %314 = vmatprep.subr.mxu0 0.0
    %315 = vmatpush1.msra.mxu0 %v287
    %316 = vmatprep.subr.mxu0 0.0
    %317 = vmatpush1.msra.mxu0 %v288
    %318 = vmatprep.subr.mxu0 0.0
    %319 = vmatpush1.msra.mxu0 %v289
    %320 = vmatprep.subr.mxu0 0.0
    %321 = vmatpush1.msra.mxu0 %v290
    %322 = vmatprep.subr.mxu0 0.0
    %323 = vmatpush1.msra.mxu0 %v291
    %324 = vmatprep.subr.mxu0 0.0
    %325 = vmatpush1.msra.mxu0 %v292
    %326 = vmatprep.subr.mxu0 0.0
    %327 = vmatpush1.msra.mxu0 %v293
    %328 = vmatprep.subr.mxu0 0.0
    %329 = vmatpush1.msra.mxu0 %v294
    %330 = vmatprep.subr.mxu0 0.0
    %331 = vmatpush1.msra.mxu0 %v295
    %332 = vmatprep.subr.mxu0 0.0
    %333 = vmatpush1.msra.mxu0 %v296
    %334 = vmatprep.subr.mxu0 0.0
    %335 = vmatpush1.msra.mxu0 %v297
    %336 = vmatprep.subr.mxu0 0.0
    %337 = vmatpush1.msra.mxu0 %v298
    %338 = vmatprep.subr.mxu0 0.0
    %339 = vmatpush1.msra.mxu0 0.0
    %340 = vmatprep.subr.mxu0 0.0
    %341 = vmatpush1.msra.mxu0 0.0
    %342 = vmatprep.subr.mxu0 0.0
    %343 = vmatpush1.msra.mxu0 0.0
    %344 = vmatprep.subr.mxu0 0.0
    %345 = vmatpush1.msra.mxu0 0.0
    %346 = vmatprep.subr.mxu0 0.0
    %347 = vmatpush1.msra.mxu0 0.0
    %348 = vmatprep.subr.mxu0 0.0
    %349 = vmatpush1.msra.mxu0 0.0
    %350 = vmatprep.subr.mxu0 0.0
    %351 = vmatpush1.msra.mxu0 0.0
    %352 = vmatprep.subr.mxu0 0.0
    %353 = vmatpush1.msra.mxu0 0.0
    %354 = vmatprep.subr.mxu0 0.0
    %355 = vmatpush1.msra.mxu0 0.0
    %356 = vmatprep.subr.mxu0 0.0
    %357 = vmatpush1.msra.mxu0 0.0
    %358 = vmatprep.subr.mxu0 0.0
    %359 = vmatpush1.msra.mxu0 0.0
    %360 = vmatprep.subr.mxu0 0.0
    %361 = vmatpush1.msra.mxu0 0.0
    %362 = vmatprep.subr.mxu0 0.0
    %363 = vmatpush1.msra.mxu0 0.0
    %364 = vmatprep.subr.mxu0 0.0
    %365 = vmatpush1.msra.mxu0 0.0
    %366 = vmatprep.subr.mxu0 0.0
    %367 = vmatpush1.msra.mxu0 0.0
    %368 = vmatprep.subr.mxu0 0.0
    %369 = vmatpush1.msra.mxu0 0.0
    %370 = vmatprep.mubr.f32.mxu0 0.0
    %371 = vmatmul.mubr.f32.gmra.mrb[0].mxu0 %v282
    %v372 = vpop.f32.mrb[0].mxu0
    %v373 = vadd.f32 %v304, %v372
    %v374 = vpop.f32.mrb[0].mxu0
    %375 = vdwg.mxu0
    %376 = vst [vmem:[#allocation8] sm:$0x3] %v373
    // Predicated region
    $region34: #{subnet_fc_forward.1} parent=1 // pred_check
      _
    $region35: #{subnet_fc_forward.1} parent=1 // pred_check_branch
      %378 = sbr.rel (0) target = $region37
    $region36: #{subnet_fc_forward.1} parent=1 // pred_region
      %s380 = ssub.s32 32, 32
      %381 = vsyncadd [#allocation4], %s380
      %s383 = sshll.u32 [#allocation8], 4
      %s384 = int_to_ptr.vmem [resolvable:$true] %s383
      %386 = dma.vmem_to_hbm [thread:$0]  %s384, 32, %s5, [#allocation4]
    $region37: #{subnet_fc_forward.1} parent=1 // pred_fallthru
      _
    // Predicated region
    $region38: #{subnet_fc_forward.1} parent=1 // pred_check
      _
    $region39: #{subnet_fc_forward.1} parent=1 // pred_check_branch
      %388 = sbr.rel (0) target = $region41
    $region40: #{subnet_fc_forward.1} parent=1 // pred_region
      %389 = dma.done [#allocation4], 32
    $region41: #{subnet_fc_forward.1} parent=1 // pred_fallthru
      _
    %390 = vsyncpa [#allocation3], 1
    %391 = vsyncpa [#allocation6], 1
    %392 = vsyncpa [#allocation4], 1

</llo_original>
